<compile_context>
chip_gen: v7x
topology: tpu7x:2x2x1
jax: 0.10.0
libtpu: 0.0.40
codegen_flags: <defaults>
</compile_context>

<pallas_src>
import jax
import jax.numpy as jnp
from jax.experimental import pallas as pl
from jax.experimental.pallas import tpu as pltpu

IN_FEATURES = 28 * 28    # 784
OUT_FEATURES = 10
N_PAD = 128              # lane-dense output width (multiple of 128)
_X_LANE_ROUND = 896      # 784 lanes round up to 896 in VMEM (budgeting only)


def _round_up(x, m):
    return ((x + m - 1) // m) * m


def _linear_kernel(x_ref, w_ref, b_ref, o_ref):
    # x_ref: (TM, 784) VMEM   w_ref: (784, 128) VMEM (resident)
    # b_ref: (1, 128)  VMEM   o_ref: (TM, 128)  VMEM
    acc = jnp.dot(x_ref[...], w_ref[...], preferred_element_type=jnp.float32)
    o_ref[...] = (acc + b_ref[...]).astype(o_ref.dtype)


def prepare_params(weight, bias):
    """Transpose + zero-pad parameters to 128 lanes.

    Hoisted out of the per-call path: call once at parameter-init time and
    reuse the result for every forward call.

    Args:
      weight: (10, 784)  (PyTorch nn.Linear convention: (out, in))
      bias:   (10,)
    Returns:
      w_t: (784, 128), b2: (1, 128) -- columns 10..127 are exact zeros.
    """
    dt = weight.dtype
    w_t = jnp.zeros((IN_FEATURES, N_PAD), dt).at[:, :OUT_FEATURES].set(weight.T)
    b2 = jnp.zeros((1, N_PAD), dt).at[:, :OUT_FEATURES].set(bias.astype(dt))
    return w_t, b2


def logistic_regression_forward(x, w_t, b2, *, block_b=4096):
    """Forward pass: logits = flatten(x) @ W.T + b.

    Args:
      x:   (B, 1, 28, 28) (or anything flattening to (B, 784)); f32 or bf16.
      w_t: (784, 128) prepared weight (see prepare_params).
      b2:  (1, 128)   prepared bias.
      block_b: max batch tile size (rounded to a multiple of 8).
    Returns:
      (B, 10) logits in x's dtype (f32 accumulation inside the kernel).
    """
    B = x.shape[0]
    x_flat = x.reshape(B, -1)
    assert x_flat.shape[1] == IN_FEATURES, x_flat.shape

    # Tile selection: multiple of 8 (sublane constraint), capped at block_b,
    # and clamped to ceil(B/2) so the grid has >=2 steps whenever B allows it
    # (lets v7x shard the "parallel" batch axis across both TensorCores).
    block_b = _round_up(max(block_b, 8), 8)
    half = _round_up(-(-B // 2), 8)
    tm = max(8, min(block_b, half))
    grid_steps = pl.cdiv(B, tm)          # partial last block: reads past B are
                                         # masked, tail output rows are masked.

    # Explicit VMEM budget: double-buffered x tiles (784 lanes round to 896),
    # double-buffered output tiles, resident W/bias, plus headroom.  Stays
    # under v7x's 64 MiB/TC at the default TM cap.
    x_item = jnp.dtype(x_flat.dtype).itemsize
    w_item = jnp.dtype(w_t.dtype).itemsize
    vmem_bytes = (2 * tm * _X_LANE_ROUND * x_item
                  + 2 * tm * N_PAD * x_item
                  + IN_FEATURES * N_PAD * w_item
                  + N_PAD * w_item)
    vmem_limit = min(int(vmem_bytes * 1.3) + (4 << 20), 56 << 20)

    out = pl.pallas_call(
        _linear_kernel,
        out_shape=jax.ShapeDtypeStruct((B, N_PAD), x_flat.dtype),
        grid=(grid_steps,),
        in_specs=[
            pl.BlockSpec((tm, IN_FEATURES), lambda i: (i, 0)),     # streamed
            pl.BlockSpec((IN_FEATURES, N_PAD), lambda i: (0, 0)),  # resident
            pl.BlockSpec((1, N_PAD), lambda i: (0, 0)),            # resident
        ],
        out_specs=pl.BlockSpec((tm, N_PAD), lambda i: (i, 0)),
        compiler_params=pltpu.CompilerParams(
            dimension_semantics=("parallel",),
            vmem_limit_bytes=vmem_limit,
        ),
        cost_estimate=pl.CostEstimate(
            flops=2 * grid_steps * tm * IN_FEATURES * N_PAD,
            transcendentals=0,
            bytes_accessed=(grid_steps * tm * IN_FEATURES * x_item   # x read
                            + IN_FEATURES * N_PAD * w_item           # W read
                            + grid_steps * tm * N_PAD * x_item),     # out write
        ),
    )(x_flat, w_t, b2)

    # Only the zero-padded output lanes need slicing (no batch padding exists).
    return out[:, :OUT_FEATURES]


def multiple_logistic_regression(x, weight, bias, *, block_b=4096):
    """Convenience wrapper taking raw PyTorch-convention parameters.

    For repeated calls, call prepare_params() once and use
    logistic_regression_forward() directly to avoid re-doing the padding.
    """
    w_t, b2 = prepare_params(weight, bias)
    return logistic_regression_forward(x, w_t, b2, block_b=block_b)


if __name__ == "__main__":
    key = jax.random.PRNGKey(0)
    k_x, k_w, k_b = jax.random.split(key, 3)

    B = 2
    # NCHW MNIST-style input, consistent with the PyTorch module.
    x = jax.random.normal(k_x, (B, 1, 28, 28), dtype=jnp.float32)

    # Deterministic parameter init (shapes match nn.Linear(784, 10)).
    bound = 1.0 / (IN_FEATURES ** 0.5)
    weight = jax.random.uniform(
        k_w, (OUT_FEATURES, IN_FEATURES), minval=-bound, maxval=bound,
        dtype=jnp.float32)
    bias = jax.random.uniform(
        k_b, (OUT_FEATURES,), minval=-bound, maxval=bound, dtype=jnp.float32)

    out = multiple_logistic_regression(x, weight, bias)
    out = jax.block_until_ready(out)

    # Reference in plain JAX (same math as PyTorch: x.view(B,-1) @ W.T + b).
    ref = x.reshape(B, -1) @ weight.T + bias
    assert out.shape == (B, OUT_FEATURES), out.shape
    assert jnp.allclose(out, ref, atol=1e-4, rtol=1e-4)

    print("KERNEL_OK")
</pallas_src>

<mosaic_0001>
module attributes {stable_mosaic.version = 11 : i64} {
  func.func @_linear_kernel(%arg0: i32, %arg1: memref<8x784xf32, #tpu.memory_space<vmem>>, %arg2: memref<784x128xf32, #tpu.memory_space<vmem>>, %arg3: memref<1x128xf32, #tpu.memory_space<vmem>>, %arg4: memref<8x128xf32, #tpu.memory_space<vmem>>) attributes {dimension_semantics = [#tpu.dimension_semantics<parallel>], iteration_bounds = array<i64: 1>, scalar_prefetch = 0 : i64, scratch_operands = 0 : i64, tpu.core_type = #tpu.core_type<tc>, window_params = [{transform_indices = @transform_0, window_bounds = array<i64: 8, 784>}, {pipeline_mode = #tpu.pipeline_mode<synchronous>, transform_indices = @transform_1, window_bounds = array<i64: 784, 128>}, {pipeline_mode = #tpu.pipeline_mode<synchronous>, transform_indices = @transform_2, window_bounds = array<i64: 1, 128>}, {transform_indices = @transform_3, window_bounds = array<i64: 8, 128>}]} {
    %c0 = arith.constant 0 : index
    %c0_0 = arith.constant 0 : index
    %0 = vector.load %arg1[%c0, %c0_0] : memref<8x784xf32, #tpu.memory_space<vmem>>, vector<8x784xf32>
    %c0_1 = arith.constant 0 : index
    %c0_2 = arith.constant 0 : index
    %1 = vector.load %arg2[%c0_1, %c0_2] : memref<784x128xf32, #tpu.memory_space<vmem>>, vector<784x128xf32>
    %cst = arith.constant dense<0.000000e+00> : vector<8x128xf32>
    %2 = tpu.matmul %0, %1, %cst {dimension_numbers = #tpu.dot_dimension_numbers<[1], [0], [0], [1], [0, 0, 1, 1], [], []>} : vector<8x784xf32>, vector<784x128xf32>, vector<8x128xf32> -> vector<8x128xf32>
    %c0_3 = arith.constant 0 : index
    %c0_4 = arith.constant 0 : index
    %3 = vector.load %arg3[%c0_3, %c0_4] : memref<1x128xf32, #tpu.memory_space<vmem>>, vector<1x128xf32>
    %4 = vector.broadcast %3 : vector<1x128xf32> to vector<8x128xf32>
    %5 = arith.addf %2, %4 : vector<8x128xf32>
    %c0_5 = arith.constant 0 : index
    %c0_6 = arith.constant 0 : index
    %6 = vector.load %arg4[%c0_5, %c0_6] : memref<8x128xf32, #tpu.memory_space<vmem>>, vector<8x128xf32>
    tpu.vector_store %arg4[%c0_5, %c0_6], %5 {strides = array<i32>} : memref<8x128xf32, #tpu.memory_space<vmem>>, vector<8x128xf32>,
    return
  }
  func.func @transform_0(%arg0: i32) -> (i32, i32) {
    %c0_i32 = arith.constant 0 : i32
    %c0_i32_0 = arith.constant 0 : i32
    return %arg0, %c0_i32 : i32, i32
  }
  func.func @transform_1(%arg0: i32) -> (i32, i32) {
    %c0_i32 = arith.constant 0 : i32
    %c0_i32_0 = arith.constant 0 : i32
    %c0_i32_1 = arith.constant 0 : i32
    return %c0_i32, %c0_i32_0 : i32, i32
  }
  func.func @transform_2(%arg0: i32) -> (i32, i32) {
    %c0_i32 = arith.constant 0 : i32
    %c0_i32_0 = arith.constant 0 : i32
    %c0_i32_1 = arith.constant 0 : i32
    return %c0_i32, %c0_i32_0 : i32, i32
  }
  func.func @transform_3(%arg0: i32) -> (i32, i32) {
    %c0_i32 = arith.constant 0 : i32
    %c0_i32_0 = arith.constant 0 : i32
    return %arg0, %c0_i32 : i32, i32
  }
}

</mosaic_0001>

<llo_original>
// kernel: tpu_custom_call.1
$region0: #{tpu_custom_call.1}
  #allocation0 [shape = 'u32[]', space=smem, size = 0x4, offset = 0x4, fixed_abs, tag = 'smem constant byte address 0x4 - core index']
  #allocation1 [shape = 'u32[144,128]{1,0:T(1,128)}', space=vmem, size = 0x12000, scoped, tag = 'internal scratch']
  %s0 = inlined_call_operand.hbm [shape: f32[2,784], index: 0, kind: input, shape index: {}]
  %s1 = inlined_call_operand.hbm [shape: f32[784,128], index: 1, kind: input, shape index: {}]
  %s2 = inlined_call_operand.vmem [shape: f32[1,128], index: 2, kind: input, shape index: {}]
  %s3 = inlined_call_operand.hbm [shape: f32[2,128], index: 3, kind: output, shape index: {}]
  %s4 = sld [smem:[#allocation0]]
  $region30: #{tpu_custom_call.1} parent=0
    _
  %s6 = ssub.s32 1, %s4
  %s7 = scalar_select 0, %s6, %s4
  $region1: #{tpu_custom_call.1} parent=0
    #allocation2 [shape = 'u8[28672]{0}', space=vmem, size = 0x7000, scoped, tag = 'input window, operand 0, single buffered']
    #allocation3 [shape = 's32[1]{0}', space=sflag, size = 0x4, scoped, tag = 'scoped memory for tpu_custom_call.1']
    #allocation4 [shape = 's32[1]{0}', space=sflag, size = 0x4, scoped, tag = 'scoped memory for tpu_custom_call.1']
    #allocation5 [shape = 'u8[401408]{0}', space=vmem, size = 0x62000, scoped, tag = 'input window, operand 1, single buffered']
    #allocation6 [shape = 's32[1]{0}', space=sflag, size = 0x4, scoped, tag = 'scoped memory for tpu_custom_call.1']
    #allocation7 [shape = 'u8[4096]{0}', space=vmem, size = 0x1000, scoped, tag = 'output window, operand 0, single buffered']
    %8 = vsyncpa [#allocation3], 0
    %9 = vsyncpa [#allocation6], 0
    %10 = vsyncpa [#allocation4], 0
    // Predicated region
    $region2: #{tpu_custom_call.1} parent=1 // pred_check
      _
    $region3: #{tpu_custom_call.1} parent=1 // pred_check_branch
      %12 = sbr.rel (0) target = $region5
    $region4: #{tpu_custom_call.1} parent=1 // pred_region
      %s14 = ssub.s32 896, 224
      %15 = vsyncadd [#allocation3], %s14
      %s16 = sshll.u32 [#allocation2], 4
      %s17 = int_to_ptr.vmem [resolvable:$true] %s16
      %22 = dma.hbm_to_vmem [thread:$0]  %s0, 224, %s17, [#allocation3], 224, 224, 14
    $region5: #{tpu_custom_call.1} parent=1 // pred_fallthru
      _
    // Predicated region
    $region6: #{tpu_custom_call.1} parent=1 // pred_check
      _
    $region7: #{tpu_custom_call.1} parent=1 // pred_check_branch
      %24 = sbr.rel (0) target = $region9
    $region8: #{tpu_custom_call.1} parent=1 // pred_region
      %s26 = ssub.s32 12544, 12544
      %27 = vsyncadd [#allocation6], %s26
      %s28 = sshll.u32 [#allocation5], 4
      %s29 = int_to_ptr.vmem [resolvable:$true] %s28
      %34 = dma.hbm_to_vmem [thread:$0]  %s1, 12544, %s29, [#allocation6], 128, 128, 8
    $region9: #{tpu_custom_call.1} parent=1 // pred_fallthru
      _
    // Predicated region
    $region10: #{tpu_custom_call.1} parent=1 // pred_check
      _
    $region11: #{tpu_custom_call.1} parent=1 // pred_check_branch
      %36 = sbr.rel (0) target = $region13
    $region12: #{tpu_custom_call.1} parent=1 // pred_region
      _
    $region13: #{tpu_custom_call.1} parent=1 // pred_fallthru
      _
    // Predicated region
    $region14: #{tpu_custom_call.1} parent=1 // pred_check
      _
    $region15: #{tpu_custom_call.1} parent=1 // pred_check_branch
      %38 = sbr.rel (0) target = $region17
    $region16: #{tpu_custom_call.1} parent=1 // pred_region
      %39 = dma.done [#allocation3], 896
    $region17: #{tpu_custom_call.1} parent=1 // pred_fallthru
      _
    // Predicated region
    $region18: #{tpu_custom_call.1} parent=1 // pred_check
      _
    $region19: #{tpu_custom_call.1} parent=1 // pred_check_branch
      %41 = sbr.rel (0) target = $region21
    $region20: #{tpu_custom_call.1} parent=1 // pred_region
      %42 = dma.done [#allocation6], 12544
    $region21: #{tpu_custom_call.1} parent=1 // pred_fallthru
      _
    %v43 = vld [vmem:[#allocation2] sm:$0xff]
    %v44 = vld [vmem:[#allocation2 + $0x8] sm:$0x3f]
    %v45 = vld [vmem:[#allocation2 + $0xe] sm:$0xff]
    %v46 = vld [vmem:[#allocation2 + $0x16] sm:$0x3f]
    %v47 = vld [vmem:[#allocation2 + $0x1c] sm:$0xff]
    %v48 = vld [vmem:[#allocation2 + $0x24] sm:$0x3f]
    %v49 = vld [vmem:[#allocation2 + $0x2a] sm:$0xff]
    %v50 = vld [vmem:[#allocation2 + $0x32] sm:$0x3f]
    %v51 = vld [vmem:[#allocation5] sm:$0xff]
    %v52 = vld [vmem:[#allocation5 + $0x8] sm:$0xff]
    %v53 = vld [vmem:[#allocation5 + $0x10] sm:$0xff]
    %v54 = vld [vmem:[#allocation5 + $0x18] sm:$0xff]
    %v55 = vld [vmem:[#allocation5 + $0x20] sm:$0xff]
    %v56 = vld [vmem:[#allocation5 + $0x28] sm:$0xff]
    %v57 = vld [vmem:[#allocation5 + $0x30] sm:$0xff]
    %v58 = vld [vmem:[#allocation5 + $0x38] sm:$0xff]
    %v59 = vld [vmem:[#allocation5 + $0x40] sm:$0xff]
    %v60 = vld [vmem:[#allocation5 + $0x48] sm:$0xff]
    %v61 = vld [vmem:[#allocation5 + $0x50] sm:$0xff]
    %v62 = vld [vmem:[#allocation5 + $0x58] sm:$0xff]
    %v63 = vld [vmem:[#allocation5 + $0x60] sm:$0xff]
    %v64 = vld [vmem:[#allocation5 + $0x68] sm:$0xff]
    %v65 = vld [vmem:[#allocation5 + $0x70] sm:$0xff]
    %v66 = vld [vmem:[#allocation5 + $0x78] sm:$0xff]
    %v67 = vld [vmem:[#allocation5 + $0x80] sm:$0xff]
    %v68 = vld [vmem:[#allocation5 + $0x88] sm:$0xff]
    %v69 = vld [vmem:[#allocation5 + $0x90] sm:$0xff]
    %v70 = vld [vmem:[#allocation5 + $0x98] sm:$0xff]
    %v71 = vld [vmem:[#allocation5 + $0xa0] sm:$0xff]
    %v72 = vld [vmem:[#allocation5 + $0xa8] sm:$0xff]
    %v73 = vld [vmem:[#allocation5 + $0xb0] sm:$0xff]
    %v74 = vld [vmem:[#allocation5 + $0xb8] sm:$0xff]
    %v75 = vld [vmem:[#allocation5 + $0xc0] sm:$0xff]
    %v76 = vld [vmem:[#allocation5 + $0xc8] sm:$0xff]
    %v77 = vld [vmem:[#allocation5 + $0xd0] sm:$0xff]
    %v78 = vld [vmem:[#allocation5 + $0xd8] sm:$0xff]
    %v79 = vld [vmem:[#allocation5 + $0xe0] sm:$0xff]
    %v80 = vld [vmem:[#allocation5 + $0xe8] sm:$0xff]
    %v81 = vld [vmem:[#allocation5 + $0xf0] sm:$0xff]
    %v82 = vld [vmem:[#allocation5 + $0xf8] sm:$0xff]
    %v83 = vld [vmem:[#allocation5 + $0x100] sm:$0xff]
    %v84 = vld [vmem:[#allocation5 + $0x108] sm:$0xff]
    %v85 = vld [vmem:[#allocation5 + $0x110] sm:$0xff]
    %v86 = vld [vmem:[#allocation5 + $0x118] sm:$0xff]
    %v87 = vld [vmem:[#allocation5 + $0x120] sm:$0xff]
    %v88 = vld [vmem:[#allocation5 + $0x128] sm:$0xff]
    %v89 = vld [vmem:[#allocation5 + $0x130] sm:$0xff]
    %v90 = vld [vmem:[#allocation5 + $0x138] sm:$0xff]
    %v91 = vld [vmem:[#allocation5 + $0x140] sm:$0xff]
    %v92 = vld [vmem:[#allocation5 + $0x148] sm:$0xff]
    %v93 = vld [vmem:[#allocation5 + $0x150] sm:$0xff]
    %v94 = vld [vmem:[#allocation5 + $0x158] sm:$0xff]
    %v95 = vld [vmem:[#allocation5 + $0x160] sm:$0xff]
    %v96 = vld [vmem:[#allocation5 + $0x168] sm:$0xff]
    %v97 = vld [vmem:[#allocation5 + $0x170] sm:$0xff]
    %v98 = vld [vmem:[#allocation5 + $0x178] sm:$0xff]
    %v99 = vld [vmem:[#allocation5 + $0x180] sm:$0xff]
    %v100 = vld [vmem:[#allocation5 + $0x188] sm:$0xff]
    %v101 = vld [vmem:[#allocation5 + $0x190] sm:$0xff]
    %v102 = vld [vmem:[#allocation5 + $0x198] sm:$0xff]
    %v103 = vld [vmem:[#allocation5 + $0x1a0] sm:$0xff]
    %v104 = vld [vmem:[#allocation5 + $0x1a8] sm:$0xff]
    %v105 = vld [vmem:[#allocation5 + $0x1b0] sm:$0xff]
    %v106 = vld [vmem:[#allocation5 + $0x1b8] sm:$0xff]
    %v107 = vld [vmem:[#allocation5 + $0x1c0] sm:$0xff]
    %v108 = vld [vmem:[#allocation5 + $0x1c8] sm:$0xff]
    %v109 = vld [vmem:[#allocation5 + $0x1d0] sm:$0xff]
    %v110 = vld [vmem:[#allocation5 + $0x1d8] sm:$0xff]
    %v111 = vld [vmem:[#allocation5 + $0x1e0] sm:$0xff]
    %v112 = vld [vmem:[#allocation5 + $0x1e8] sm:$0xff]
    %v113 = vld [vmem:[#allocation5 + $0x1f0] sm:$0xff]
    %v114 = vld [vmem:[#allocation5 + $0x1f8] sm:$0xff]
    %v115 = vld [vmem:[#allocation5 + $0x200] sm:$0xff]
    %v116 = vld [vmem:[#allocation5 + $0x208] sm:$0xff]
    %v117 = vld [vmem:[#allocation5 + $0x210] sm:$0xff]
    %v118 = vld [vmem:[#allocation5 + $0x218] sm:$0xff]
    %v119 = vld [vmem:[#allocation5 + $0x220] sm:$0xff]
    %v120 = vld [vmem:[#allocation5 + $0x228] sm:$0xff]
    %v121 = vld [vmem:[#allocation5 + $0x230] sm:$0xff]
    %v122 = vld [vmem:[#allocation5 + $0x238] sm:$0xff]
    %v123 = vld [vmem:[#allocation5 + $0x240] sm:$0xff]
    %v124 = vld [vmem:[#allocation5 + $0x248] sm:$0xff]
    %v125 = vld [vmem:[#allocation5 + $0x250] sm:$0xff]
    %v126 = vld [vmem:[#allocation5 + $0x258] sm:$0xff]
    %v127 = vld [vmem:[#allocation5 + $0x260] sm:$0xff]
    %v128 = vld [vmem:[#allocation5 + $0x268] sm:$0xff]
    %v129 = vld [vmem:[#allocation5 + $0x270] sm:$0xff]
    %v130 = vld [vmem:[#allocation5 + $0x278] sm:$0xff]
    %v131 = vld [vmem:[#allocation5 + $0x280] sm:$0xff]
    %v132 = vld [vmem:[#allocation5 + $0x288] sm:$0xff]
    %v133 = vld [vmem:[#allocation5 + $0x290] sm:$0xff]
    %v134 = vld [vmem:[#allocation5 + $0x298] sm:$0xff]
    %v135 = vld [vmem:[#allocation5 + $0x2a0] sm:$0xff]
    %v136 = vld [vmem:[#allocation5 + $0x2a8] sm:$0xff]
    %v137 = vld [vmem:[#allocation5 + $0x2b0] sm:$0xff]
    %v138 = vld [vmem:[#allocation5 + $0x2b8] sm:$0xff]
    %v139 = vld [vmem:[#allocation5 + $0x2c0] sm:$0xff]
    %v140 = vld [vmem:[#allocation5 + $0x2c8] sm:$0xff]
    %v141 = vld [vmem:[#allocation5 + $0x2d0] sm:$0xff]
    %v142 = vld [vmem:[#allocation5 + $0x2d8] sm:$0xff]
    %v143 = vld [vmem:[#allocation5 + $0x2e0] sm:$0xff]
    %v144 = vld [vmem:[#allocation5 + $0x2e8] sm:$0xff]
    %v145 = vld [vmem:[#allocation5 + $0x2f0] sm:$0xff]
    %v146 = vld [vmem:[#allocation5 + $0x2f8] sm:$0xff]
    %v147 = vld [vmem:[#allocation5 + $0x300] sm:$0xff]
    %v148 = vld [vmem:[#allocation5 + $0x308] sm:$0xff]
    %v149 = vld [vmem:[%s2] sm:$0x1]
    %v151 = vlaneseq
    %v152 = vshrl.u32 %v151, 7
    %v153 = vsub.s32 0, %v152
    %v154 = vrot.slane %v149, %v153
    %v164 = vcombine.low %v43, %v45
    %v165 = vcombine.high %v43, %v45
    %v166 = vcombine.low %v47, %v49
    %v167 = vcombine.high %v47, %v49
    %v169 = vunpack.c.l.s4 1983009808
    %v170 = vunpack.c.0.s8 %v169
    %v171 = vlaneseq
    %v172 = vshrl.u32 %v171, 7
    %v173 = vsub.s32 %v170, %v172
    %v174 = vrot.slane %v164, %v173
    %v176 = vunpack.c.l.s4 1983009808
    %v177 = vunpack.c.0.s8 %v176
    %v178 = vlaneseq
    %v179 = vshrl.u32 %v178, 7
    %v180 = vsub.s32 %v177, %v179
    %v181 = vrot.slane %v165, %v180
    %v183 = vunpack.c.l.s4 1983009808
    %v184 = vunpack.c.0.s8 %v183
    %v185 = vlaneseq
    %v186 = vshrl.u32 %v185, 7
    %v187 = vsub.s32 %v184, %v186
    %v188 = vrot.slane %v166, %v187
    %v190 = vunpack.c.l.s4 1983009808
    %v191 = vunpack.c.0.s8 %v190
    %v192 = vlaneseq
    %v193 = vshrl.u32 %v192, 7
    %v194 = vsub.s32 %v191, %v193
    %v195 = vrot.slane %v167, %v194
    %v196 = vcombine.low %v174, %v188
    %v197 = vcombine.high %v174, %v188
    %v198 = vcombine.low %v181, %v195
    %v199 = vcombine.high %v181, %v195
    %v200 = vcombine.low %v44, %v46
    %v201 = vcombine.high %v44, %v46
    %v202 = vcombine.low %v48, %v50
    %v203 = vcombine.high %v48, %v50
    %v205 = vunpack.c.l.s4 1983009808
    %v206 = vunpack.c.0.s8 %v205
    %v207 = vlaneseq
    %v208 = vshrl.u32 %v207, 7
    %v209 = vsub.s32 %v206, %v208
    %v210 = vrot.slane %v200, %v209
    %v212 = vunpack.c.l.s4 1983009808
    %v213 = vunpack.c.0.s8 %v212
    %v214 = vlaneseq
    %v215 = vshrl.u32 %v214, 7
    %v216 = vsub.s32 %v213, %v215
    %v217 = vrot.slane %v201, %v216
    %v219 = vunpack.c.l.s4 1983009808
    %v220 = vunpack.c.0.s8 %v219
    %v221 = vlaneseq
    %v222 = vshrl.u32 %v221, 7
    %v223 = vsub.s32 %v220, %v222
    %v224 = vrot.slane %v202, %v223
    %v226 = vunpack.c.l.s4 1983009808
    %v227 = vunpack.c.0.s8 %v226
    %v228 = vlaneseq
    %v229 = vshrl.u32 %v228, 7
    %v230 = vsub.s32 %v227, %v229
    %v231 = vrot.slane %v203, %v230
    %v232 = vcombine.low %v210, %v224
    %v233 = vcombine.high %v210, %v224
    %v234 = vcombine.low %v217, %v231
    %vm241 = vcmask 130048
    %v242 = vsel %vm241, %v234, 0
    %244 = vmatprep.subr.mxu0 0.0
    %245 = vmatpush1.msra.mxu0 %v51
    %246 = vmatprep.subr.mxu0 0.0
    %247 = vmatpush1.msra.mxu0 %v52
    %248 = vmatprep.subr.mxu0 0.0
    %249 = vmatpush1.msra.mxu0 %v53
    %250 = vmatprep.subr.mxu0 0.0
    %251 = vmatpush1.msra.mxu0 %v54
    %252 = vmatprep.subr.mxu0 0.0
    %253 = vmatpush1.msra.mxu0 %v55
    %254 = vmatprep.subr.mxu0 0.0
    %255 = vmatpush1.msra.mxu0 %v56
    %256 = vmatprep.subr.mxu0 0.0
    %257 = vmatpush1.msra.mxu0 %v57
    %258 = vmatprep.subr.mxu0 0.0
    %259 = vmatpush1.msra.mxu0 %v58
    %260 = vmatprep.subr.mxu0 0.0
    %261 = vmatpush1.msra.mxu0 %v59
    %262 = vmatprep.subr.mxu0 0.0
    %263 = vmatpush1.msra.mxu0 %v60
    %264 = vmatprep.subr.mxu0 0.0
    %265 = vmatpush1.msra.mxu0 %v61
    %266 = vmatprep.subr.mxu0 0.0
    %267 = vmatpush1.msra.mxu0 %v62
    %268 = vmatprep.subr.mxu0 0.0
    %269 = vmatpush1.msra.mxu0 %v63
    %270 = vmatprep.subr.mxu0 0.0
    %271 = vmatpush1.msra.mxu0 %v64
    %272 = vmatprep.subr.mxu0 0.0
    %273 = vmatpush1.msra.mxu0 %v65
    %274 = vmatprep.subr.mxu0 0.0
    %275 = vmatpush1.msra.mxu0 %v66
    %276 = vmatprep.subr.mxu0 0.0
    %277 = vmatpush1.msra.mxu0 %v67
    %278 = vmatprep.subr.mxu0 0.0
    %279 = vmatpush1.msra.mxu0 %v68
    %280 = vmatprep.subr.mxu0 0.0
    %281 = vmatpush1.msra.mxu0 %v69
    %282 = vmatprep.subr.mxu0 0.0
    %283 = vmatpush1.msra.mxu0 %v70
    %284 = vmatprep.subr.mxu0 0.0
    %285 = vmatpush1.msra.mxu0 %v71
    %286 = vmatprep.subr.mxu0 0.0
    %287 = vmatpush1.msra.mxu0 %v72
    %288 = vmatprep.subr.mxu0 0.0
    %289 = vmatpush1.msra.mxu0 %v73
    %290 = vmatprep.subr.mxu0 0.0
    %291 = vmatpush1.msra.mxu0 %v74
    %292 = vmatprep.subr.mxu0 0.0
    %293 = vmatpush1.msra.mxu0 %v75
    %294 = vmatprep.subr.mxu0 0.0
    %295 = vmatpush1.msra.mxu0 %v76
    %296 = vmatprep.subr.mxu0 0.0
    %297 = vmatpush1.msra.mxu0 %v77
    %298 = vmatprep.subr.mxu0 0.0
    %299 = vmatpush1.msra.mxu0 %v78
    %300 = vmatprep.subr.mxu0 0.0
    %301 = vmatpush1.msra.mxu0 %v79
    %302 = vmatprep.subr.mxu0 0.0
    %303 = vmatpush1.msra.mxu0 %v80
    %304 = vmatprep.subr.mxu0 0.0
    %305 = vmatpush1.msra.mxu0 %v81
    %306 = vmatprep.subr.mxu0 0.0
    %307 = vmatpush1.msra.mxu0 %v82
    %308 = vmatprep.mubr.f32.mxu0 %v197
    %309 = vmatmul.mubr.f32.gmra.mrb[0].mxu0 %v196
    %v310 = vpop.f32.mrb[0].mxu0
    %v311 = vadd.f32 %v154, %v310
    %v312 = vpop.f32.mrb[0].mxu0
    %313 = vdwg.mxu0
    %314 = vmatprep.subr.mxu0 0.0
    %315 = vmatpush1.msra.mxu0 %v83
    %316 = vmatprep.subr.mxu0 0.0
    %317 = vmatpush1.msra.mxu0 %v84
    %318 = vmatprep.subr.mxu0 0.0
    %319 = vmatpush1.msra.mxu0 %v85
    %320 = vmatprep.subr.mxu0 0.0
    %321 = vmatpush1.msra.mxu0 %v86
    %322 = vmatprep.subr.mxu0 0.0
    %323 = vmatpush1.msra.mxu0 %v87
    %324 = vmatprep.subr.mxu0 0.0
    %325 = vmatpush1.msra.mxu0 %v88
    %326 = vmatprep.subr.mxu0 0.0
    %327 = vmatpush1.msra.mxu0 %v89
    %328 = vmatprep.subr.mxu0 0.0
    %329 = vmatpush1.msra.mxu0 %v90
    %330 = vmatprep.subr.mxu0 0.0
    %331 = vmatpush1.msra.mxu0 %v91
    %332 = vmatprep.subr.mxu0 0.0
    %333 = vmatpush1.msra.mxu0 %v92
    %334 = vmatprep.subr.mxu0 0.0
    %335 = vmatpush1.msra.mxu0 %v93
    %336 = vmatprep.subr.mxu0 0.0
    %337 = vmatpush1.msra.mxu0 %v94
    %338 = vmatprep.subr.mxu0 0.0
    %339 = vmatpush1.msra.mxu0 %v95
    %340 = vmatprep.subr.mxu0 0.0
    %341 = vmatpush1.msra.mxu0 %v96
    %342 = vmatprep.subr.mxu0 0.0
    %343 = vmatpush1.msra.mxu0 %v97
    %344 = vmatprep.subr.mxu0 0.0
    %345 = vmatpush1.msra.mxu0 %v98
    %346 = vmatprep.subr.mxu0 0.0
    %347 = vmatpush1.msra.mxu0 %v99
    %348 = vmatprep.subr.mxu0 0.0
    %349 = vmatpush1.msra.mxu0 %v100
    %350 = vmatprep.subr.mxu0 0.0
    %351 = vmatpush1.msra.mxu0 %v101
    %352 = vmatprep.subr.mxu0 0.0
    %353 = vmatpush1.msra.mxu0 %v102
    %354 = vmatprep.subr.mxu0 0.0
    %355 = vmatpush1.msra.mxu0 %v103
    %356 = vmatprep.subr.mxu0 0.0
    %357 = vmatpush1.msra.mxu0 %v104
    %358 = vmatprep.subr.mxu0 0.0
    %359 = vmatpush1.msra.mxu0 %v105
    %360 = vmatprep.subr.mxu0 0.0
    %361 = vmatpush1.msra.mxu0 %v106
    %362 = vmatprep.subr.mxu0 0.0
    %363 = vmatpush1.msra.mxu0 %v107
    %364 = vmatprep.subr.mxu0 0.0
    %365 = vmatpush1.msra.mxu0 %v108
    %366 = vmatprep.subr.mxu0 0.0
    %367 = vmatpush1.msra.mxu0 %v109
    %368 = vmatprep.subr.mxu0 0.0
    %369 = vmatpush1.msra.mxu0 %v110
    %370 = vmatprep.subr.mxu0 0.0
    %371 = vmatpush1.msra.mxu0 %v111
    %372 = vmatprep.subr.mxu0 0.0
    %373 = vmatpush1.msra.mxu0 %v112
    %374 = vmatprep.subr.mxu0 0.0
    %375 = vmatpush1.msra.mxu0 %v113
    %376 = vmatprep.subr.mxu0 0.0
    %377 = vmatpush1.msra.mxu0 %v114
    %378 = vmatprep.mubr.f32.mxu0 %v199
    %379 = vmatmul.mubr.f32.gmra.mrb[0].mxu0 %v198
    %v380 = vpop.f32.mrb[0].mxu0
    %v381 = vadd.f32 %v311, %v380
    %v382 = vpop.f32.mrb[0].mxu0
    %383 = vdwg.mxu0
    %384 = vmatprep.subr.mxu0 0.0
    %385 = vmatpush1.msra.mxu0 %v115
    %386 = vmatprep.subr.mxu0 0.0
    %387 = vmatpush1.msra.mxu0 %v116
    %388 = vmatprep.subr.mxu0 0.0
    %389 = vmatpush1.msra.mxu0 %v117
    %390 = vmatprep.subr.mxu0 0.0
    %391 = vmatpush1.msra.mxu0 %v118
    %392 = vmatprep.subr.mxu0 0.0
    %393 = vmatpush1.msra.mxu0 %v119
    %394 = vmatprep.subr.mxu0 0.0
    %395 = vmatpush1.msra.mxu0 %v120
    %396 = vmatprep.subr.mxu0 0.0
    %397 = vmatpush1.msra.mxu0 %v121
    %398 = vmatprep.subr.mxu0 0.0
    %399 = vmatpush1.msra.mxu0 %v122
    %400 = vmatprep.subr.mxu0 0.0
    %401 = vmatpush1.msra.mxu0 %v123
    %402 = vmatprep.subr.mxu0 0.0
    %403 = vmatpush1.msra.mxu0 %v124
    %404 = vmatprep.subr.mxu0 0.0
    %405 = vmatpush1.msra.mxu0 %v125
    %406 = vmatprep.subr.mxu0 0.0
    %407 = vmatpush1.msra.mxu0 %v126
    %408 = vmatprep.subr.mxu0 0.0
    %409 = vmatpush1.msra.mxu0 %v127
    %410 = vmatprep.subr.mxu0 0.0
    %411 = vmatpush1.msra.mxu0 %v128
    %412 = vmatprep.subr.mxu0 0.0
    %413 = vmatpush1.msra.mxu0 %v129
    %414 = vmatprep.subr.mxu0 0.0
    %415 = vmatpush1.msra.mxu0 %v130
    %416 = vmatprep.subr.mxu0 0.0
    %417 = vmatpush1.msra.mxu0 %v131
    %418 = vmatprep.subr.mxu0 0.0
    %419 = vmatpush1.msra.mxu0 %v132
    %420 = vmatprep.subr.mxu0 0.0
    %421 = vmatpush1.msra.mxu0 %v133
    %422 = vmatprep.subr.mxu0 0.0
    %423 = vmatpush1.msra.mxu0 %v134
    %424 = vmatprep.subr.mxu0 0.0
    %425 = vmatpush1.msra.mxu0 %v135
    %426 = vmatprep.subr.mxu0 0.0
    %427 = vmatpush1.msra.mxu0 %v136
    %428 = vmatprep.subr.mxu0 0.0
    %429 = vmatpush1.msra.mxu0 %v137
    %430 = vmatprep.subr.mxu0 0.0
    %431 = vmatpush1.msra.mxu0 %v138
    %432 = vmatprep.subr.mxu0 0.0
    %433 = vmatpush1.msra.mxu0 %v139
    %434 = vmatprep.subr.mxu0 0.0
    %435 = vmatpush1.msra.mxu0 %v140
    %436 = vmatprep.subr.mxu0 0.0
    %437 = vmatpush1.msra.mxu0 %v141
    %438 = vmatprep.subr.mxu0 0.0
    %439 = vmatpush1.msra.mxu0 %v142
    %440 = vmatprep.subr.mxu0 0.0
    %441 = vmatpush1.msra.mxu0 %v143
    %442 = vmatprep.subr.mxu0 0.0
    %443 = vmatpush1.msra.mxu0 %v144
    %444 = vmatprep.subr.mxu0 0.0
    %445 = vmatpush1.msra.mxu0 %v145
    %446 = vmatprep.subr.mxu0 0.0
    %447 = vmatpush1.msra.mxu0 %v146
    %448 = vmatprep.mubr.f32.mxu0 %v233
    %449 = vmatmul.mubr.f32.gmra.mrb[0].mxu0 %v232
    %v450 = vpop.f32.mrb[0].mxu0
    %v451 = vadd.f32 %v381, %v450
    %v452 = vpop.f32.mrb[0].mxu0
    %453 = vdwg.mxu0
    %454 = vmatprep.subr.mxu0 0.0
    %455 = vmatpush1.msra.mxu0 %v147
    %456 = vmatprep.subr.mxu0 0.0
    %457 = vmatpush1.msra.mxu0 %v148
    %458 = vmatprep.subr.mxu0 0.0
    %459 = vmatpush1.msra.mxu0 0.0
    %460 = vmatprep.subr.mxu0 0.0
    %461 = vmatpush1.msra.mxu0 0.0
    %462 = vmatprep.subr.mxu0 0.0
    %463 = vmatpush1.msra.mxu0 0.0
    %464 = vmatprep.subr.mxu0 0.0
    %465 = vmatpush1.msra.mxu0 0.0
    %466 = vmatprep.subr.mxu0 0.0
    %467 = vmatpush1.msra.mxu0 0.0
    %468 = vmatprep.subr.mxu0 0.0
    %469 = vmatpush1.msra.mxu0 0.0
    %470 = vmatprep.subr.mxu0 0.0
    %471 = vmatpush1.msra.mxu0 0.0
    %472 = vmatprep.subr.mxu0 0.0
    %473 = vmatpush1.msra.mxu0 0.0
    %474 = vmatprep.subr.mxu0 0.0
    %475 = vmatpush1.msra.mxu0 0.0
    %476 = vmatprep.subr.mxu0 0.0
    %477 = vmatpush1.msra.mxu0 0.0
    %478 = vmatprep.subr.mxu0 0.0
    %479 = vmatpush1.msra.mxu0 0.0
    %480 = vmatprep.subr.mxu0 0.0
    %481 = vmatpush1.msra.mxu0 0.0
    %482 = vmatprep.subr.mxu0 0.0
    %483 = vmatpush1.msra.mxu0 0.0
    %484 = vmatprep.subr.mxu0 0.0
    %485 = vmatpush1.msra.mxu0 0.0
    %486 = vmatprep.subr.mxu0 0.0
    %487 = vmatpush1.msra.mxu0 0.0
    %488 = vmatprep.subr.mxu0 0.0
    %489 = vmatpush1.msra.mxu0 0.0
    %490 = vmatprep.subr.mxu0 0.0
    %491 = vmatpush1.msra.mxu0 0.0
    %492 = vmatprep.subr.mxu0 0.0
    %493 = vmatpush1.msra.mxu0 0.0
    %494 = vmatprep.subr.mxu0 0.0
    %495 = vmatpush1.msra.mxu0 0.0
    %496 = vmatprep.subr.mxu0 0.0
    %497 = vmatpush1.msra.mxu0 0.0
    %498 = vmatprep.subr.mxu0 0.0
    %499 = vmatpush1.msra.mxu0 0.0
    %500 = vmatprep.subr.mxu0 0.0
    %501 = vmatpush1.msra.mxu0 0.0
    %502 = vmatprep.subr.mxu0 0.0
    %503 = vmatpush1.msra.mxu0 0.0
    %504 = vmatprep.subr.mxu0 0.0
    %505 = vmatpush1.msra.mxu0 0.0
    %506 = vmatprep.subr.mxu0 0.0
    %507 = vmatpush1.msra.mxu0 0.0
    %508 = vmatprep.subr.mxu0 0.0
    %509 = vmatpush1.msra.mxu0 0.0
    %510 = vmatprep.subr.mxu0 0.0
    %511 = vmatpush1.msra.mxu0 0.0
    %512 = vmatprep.subr.mxu0 0.0
    %513 = vmatpush1.msra.mxu0 0.0
    %514 = vmatprep.subr.mxu0 0.0
    %515 = vmatpush1.msra.mxu0 0.0
    %516 = vmatprep.subr.mxu0 0.0
    %517 = vmatpush1.msra.mxu0 0.0
    %518 = vmatprep.mubr.f32.mxu0 0.0
    %519 = vmatmul.mubr.f32.gmra.mrb[0].mxu0 %v242
    %v520 = vpop.f32.mrb[0].mxu0
    %v521 = vadd.f32 %v451, %v520
    %v522 = vpop.f32.mrb[0].mxu0
    %523 = vdwg.mxu0
    %524 = vst [vmem:[#allocation7] sm:$0xff] %v521
    // Predicated region
    $region22: #{tpu_custom_call.1} parent=1 // pred_check
      _
    $region23: #{tpu_custom_call.1} parent=1 // pred_check_branch
      %526 = sbr.rel (0) target = $region25
    $region24: #{tpu_custom_call.1} parent=1 // pred_region
      %s528 = ssub.s32 128, 32
      %529 = vsyncadd [#allocation4], %s528
      %s530 = sshll.u32 [#allocation7], 4
      %s531 = int_to_ptr.vmem [resolvable:$true] %s530
      %536 = dma.vmem_to_hbm [thread:$0]  %s531, 32, %s3, [#allocation4], 32, 32, 2
    $region25: #{tpu_custom_call.1} parent=1 // pred_fallthru
      _
    // Predicated region
    $region26: #{tpu_custom_call.1} parent=1 // pred_check
      _
    $region27: #{tpu_custom_call.1} parent=1 // pred_check_branch
      %538 = sbr.rel (0) target = $region29
    $region28: #{tpu_custom_call.1} parent=1 // pred_region
      %539 = dma.done [#allocation4], 128
    $region29: #{tpu_custom_call.1} parent=1 // pred_fallthru
      _
    %540 = vsyncpa [#allocation3], 1
    %541 = vsyncpa [#allocation6], 1
    %542 = vsyncpa [#allocation4], 1

</llo_original>
